<compile_context>
chip_gen: v5e
topology: v5e:2x2
jax: 0.10.0
libtpu: 0.0.40
codegen_flags: <defaults>
</compile_context>

<pallas_src>
import jax
import jax.numpy as jnp
from jax.experimental import pallas as pl
from jax.experimental.pallas import tpu as pltpu

LANE = 128   # lane width (last dim of non-full blocks)
SUB = 16     # sublane multiple (safe for f32 and bf16 blocks)


def _round_up(v, m):
    return ((v + m - 1) // m) * m


def _vmem_capacity_bytes():
    """Physical VMEM per TensorCore; conservative default if the query fails."""
    try:
        info = pltpu.get_tpu_info()
        cap = int(getattr(info, "vmem_capacity_bytes", 0))
        if cap > 0:
            return cap
    except Exception:
        pass
    return 64 * 1024 * 1024  # v7x per-core size: safe lower bound everywhere


def _pad2d(a, rows, cols, dtype):
    a = jnp.asarray(a, dtype=dtype)
    return jnp.pad(a, ((0, rows - a.shape[0]), (0, cols - a.shape[1])))


# --------------------------------------------------------------------------- #
# Kernels
# --------------------------------------------------------------------------- #

def _mlp_kernel(x_ref, w1_ref, b1_ref, w2_ref, b2_ref, o_ref):
    # fc1: cast activations to bf16 in-kernel (VPU, rides under MXU slack).
    h = jnp.dot(x_ref[...].astype(jnp.bfloat16), w1_ref[...],
                preferred_element_type=jnp.float32)
    h = jnp.maximum(h + b1_ref[...], 0.0)
    # fc2 (h re-quantized to bf16 for the MXU; see precision note above).
    out = jnp.dot(h.astype(jnp.bfloat16), w2_ref[...],
                  preferred_element_type=jnp.float32)
    o_ref[...] = (out + b2_ref[...]).astype(o_ref.dtype)


def _mlp_kernel_ktiled(x_ref, w1_ref, b1_ref, w2_ref, b2_ref, o_ref, acc_ref):
    # Grid = (batch "parallel", K "arbitrary"); output block resident across K.
    k = pl.program_id(1)

    @pl.when(k == 0)
    def _():
        acc_ref[...] = jnp.zeros_like(acc_ref)

    acc_ref[...] += jnp.dot(x_ref[...].astype(jnp.bfloat16), w1_ref[...],
                            preferred_element_type=jnp.float32)

    @pl.when(k == pl.num_programs(1) - 1)
    def _():
        h = jnp.maximum(acc_ref[...] + b1_ref[...], 0.0)
        out = jnp.dot(h.astype(jnp.bfloat16), w2_ref[...],
                      preferred_element_type=jnp.float32)
        o_ref[...] = (out + b2_ref[...]).astype(o_ref.dtype)


# --------------------------------------------------------------------------- #
# One-time parameter preparation (hoisted out of the forward)
# --------------------------------------------------------------------------- #

def prepare_params(w1, b1, w2, b2, *, block_k=None):
    """Pad/cast weights once at model init.

    w1: (input_size, hidden), b1: (hidden,), w2: (hidden, output), b2: (output,)
    (i.e. nn.Linear weights already transposed to "x @ W" layout).
    """
    input_size, hidden_size = w1.shape
    output_size = w2.shape[1]
    H = _round_up(hidden_size, LANE)
    N = _round_up(output_size, LANE)

    if block_k is None:
        # Stream fc1's weight along K only when it is too big to keep resident.
        cap = _vmem_capacity_bytes()
        resident_limit = int(0.20 * 0.85 * cap)
        if input_size * H * 2 > resident_limit:
            block_k = min(512, _round_up(input_size, LANE))
    else:
        block_k = _round_up(int(block_k), LANE)

    Kp = input_size if block_k is None else _round_up(input_size, block_k)

    return dict(
        w1=_pad2d(w1, Kp, H, jnp.bfloat16),
        b1=_pad2d(jnp.reshape(b1, (1, -1)), 1, H, jnp.float32),
        w2=_pad2d(w2, H, N, jnp.bfloat16),
        b2=_pad2d(jnp.reshape(b2, (1, -1)), 1, N, jnp.float32),
        input_size=input_size, hidden_size=hidden_size, output_size=output_size,
        Kp=Kp, H=H, N=N, block_k=block_k,
    )


# --------------------------------------------------------------------------- #
# pallas_call construction
# --------------------------------------------------------------------------- #

def _invariant_spec(shape, index_map, single_buffer):
    if single_buffer:
        # Grid-invariant block: one VMEM copy is enough (no double-buffering).
        return pl.BlockSpec(shape, index_map, pipeline_mode=pl.Buffered(1))
    return pl.BlockSpec(shape, index_map)


def _vmem_bytes_estimate(tb, Kp, H, N, block_k, x_itemsize):
    """Conservative (everything double-buffered) working-set estimate."""
    inv = 2 * (H * 4 + H * N * 2 + N * 4)   # b1, w2, b2
    out = 2 * tb * N * 2                    # bf16 output tile
    if block_k is None:
        return 2 * tb * Kp * x_itemsize + 2 * Kp * H * 2 + inv + out
    return (2 * tb * block_k * x_itemsize + 2 * block_k * H * 2
            + inv + out + tb * H * 4)       # + f32 accumulator scratch


def _pallas_forward(xp, params, tb, vmem_limit, single_buffer):
    Bp = xp.shape[0]
    Kp, H, N, block_k = params["Kp"], params["H"], params["N"], params["block_k"]
    w1, b1, w2, b2 = params["w1"], params["b1"], params["w2"], params["b2"]
    nb = Bp // tb

    cost = pl.CostEstimate(
        flops=2 * Bp * (Kp * H + H * N),
        transcendentals=0,
        bytes_accessed=int(xp.size * xp.dtype.itemsize + w1.size * 2
                           + w2.size * 2 + b1.size * 4 + b2.size * 4
                           + Bp * N * 2),
    )

    if block_k is None:
        grid = (nb,)
        in_specs = [
            pl.BlockSpec((tb, Kp), lambda i: (i, 0)),                     # x tile
            _invariant_spec((Kp, H), lambda i: (0, 0), single_buffer),    # w1
            _invariant_spec((1, H), lambda i: (0, 0), single_buffer),     # b1
            _invariant_spec((H, N), lambda i: (0, 0), single_buffer),     # w2
            _invariant_spec((1, N), lambda i: (0, 0), single_buffer),     # b2
        ]
        out_specs = pl.BlockSpec((tb, N), lambda i: (i, 0))
        scratch = ()
        dims = ("parallel",)
        kernel = _mlp_kernel
    else:
        nk = Kp // block_k
        grid = (nb, nk)  # reduction axis last, marked "arbitrary"
        in_specs = [
            pl.BlockSpec((tb, block_k), lambda i, k: (i, k)),             # x tile
            pl.BlockSpec((block_k, H), lambda i, k: (k, 0)),              # w1 K-slab
            _invariant_spec((1, H), lambda i, k: (0, 0), single_buffer),  # b1
            _invariant_spec((H, N), lambda i, k: (0, 0), single_buffer),  # w2
            _invariant_spec((1, N), lambda i, k: (0, 0), single_buffer),  # b2
        ]
        out_specs = pl.BlockSpec((tb, N), lambda i, k: (i, 0))
        scratch = (pltpu.VMEM((tb, H), jnp.float32),)
        dims = ("parallel", "arbitrary")
        kernel = _mlp_kernel_ktiled

    return pl.pallas_call(
        kernel,
        out_shape=jax.ShapeDtypeStruct((Bp, N), jnp.bfloat16),
        grid_spec=pltpu.PrefetchScalarGridSpec(
            num_scalar_prefetch=0,
            grid=grid,
            in_specs=in_specs,
            out_specs=out_specs,
            scratch_shapes=scratch,
        ),
        compiler_params=pltpu.CompilerParams(
            dimension_semantics=dims,
            vmem_limit_bytes=int(vmem_limit),
        ),
        cost_estimate=cost,
    )(xp, w1, b1, w2, b2)


# --------------------------------------------------------------------------- #
# Forward
# --------------------------------------------------------------------------- #

def sentiment_classifier_forward(x, params, *, block_b=512):
    """x: (B, input_size) f32/bf16; params from prepare_params -> (B, output)."""
    B, input_size = x.shape
    if input_size != params["input_size"]:
        raise ValueError("x feature dim does not match prepared params")
    Kp, H, N, block_k = params["Kp"], params["H"], params["N"], params["block_k"]
    out_size = params["output_size"]

    cap = _vmem_capacity_bytes()
    budget = int(0.85 * cap)  # leave compiler/scratch headroom on every gen

    Bp = _round_up(B, SUB)
    tb = _round_up(min(block_b, Bp), SUB)
    # Prefer >= 2 batch tiles so the "parallel" axis spreads across both v7x TCs.
    if Bp >= 2 * SUB:
        tb = min(tb, _round_up(pl.cdiv(Bp, 2), SUB))
    # Shrink tb until the (conservatively counted) working set fits VMEM.
    while tb > SUB and _vmem_bytes_estimate(
            tb, Kp, H, N, block_k, x.dtype.itemsize) > int(0.8 * budget):
        tb = max(SUB, _round_up(tb // 2, SUB))
    Bp = _round_up(B, tb)

    est = _vmem_bytes_estimate(tb, Kp, H, N, block_k, x.dtype.itemsize)
    vmem_limit = min(budget, max(32 * 1024 * 1024, int(1.5 * est)))

    # x stays in its own dtype; only row padding (and K padding on the K-tiled
    # path) is applied — no separate cast pass over the activations.
    xp = x
    if Bp != B or Kp != input_size:
        xp = jnp.pad(x, ((0, Bp - B), (0, Kp - input_size)))

    try:
        out_padded = _pallas_forward(xp, params, tb, vmem_limit, single_buffer=True)
    except Exception:
        # pl.Buffered(1) unsupported on this jax/libtpu combo -> default buffering.
        out_padded = _pallas_forward(xp, params, tb, vmem_limit, single_buffer=False)

    # Slice off batch/output padding; upcast from the bf16 store to x.dtype.
    return out_padded[:B, :out_size].astype(x.dtype)


# --------------------------------------------------------------------------- #
# Demo / self-test
# --------------------------------------------------------------------------- #

def _random_params(key, input_size, hidden_size, output_size):
    kw1, kb1, kw2, kb2 = jax.random.split(key, 4)
    w1 = jax.random.uniform(kw1, (input_size, hidden_size), jnp.float32,
                            -1.0, 1.0) / jnp.sqrt(input_size)
    b1 = jax.random.uniform(kb1, (hidden_size,), jnp.float32,
                            -1.0, 1.0) / jnp.sqrt(input_size)
    w2 = jax.random.uniform(kw2, (hidden_size, output_size), jnp.float32,
                            -1.0, 1.0) / jnp.sqrt(hidden_size)
    b2 = jax.random.uniform(kb2, (output_size,), jnp.float32,
                            -1.0, 1.0) / jnp.sqrt(hidden_size)
    return w1, b1, w2, b2


if __name__ == "__main__":
    key = jax.random.PRNGKey(0)
    k1, k2, k3, k4 = jax.random.split(key, 4)

    # --- Test 1: small shapes, resident-weight (single-matmul-pass) path ----
    B, input_size, hidden_size, output_size = 8, 32, 64, 16
    x = jax.random.normal(k1, (B, input_size), dtype=jnp.float32)
    w1, b1, w2, b2 = _random_params(k2, input_size, hidden_size, output_size)
    params = prepare_params(w1, b1, w2, b2)           # one-time pad/cast

    out = sentiment_classifier_forward(x, params)
    out = jax.block_until_ready(out)
    ref = jnp.maximum(x @ w1 + b1, 0.0) @ w2 + b2
    assert out.shape == (B, output_size)
    assert jnp.allclose(out, ref, atol=5e-2, rtol=5e-2), "mismatch (resident path)"

    # --- Test 2: force the K-tiled (reduction-last accumulator) path --------
    B2, in2, hid2, out2 = 40, 384, 64, 8
    x2 = jax.random.normal(k3, (B2, in2), dtype=jnp.float32)
    w1b, b1b, w2b, b2b = _random_params(k4, in2, hid2, out2)
    params2 = prepare_params(w1b, b1b, w2b, b2b, block_k=256)  # Kp=512, 2 K-steps

    out_kt = sentiment_classifier_forward(x2, params2)
    out_kt = jax.block_until_ready(out_kt)
    ref2 = jnp.maximum(x2 @ w1b + b1b, 0.0) @ w2b + b2b
    assert out_kt.shape == (B2, out2)
    assert jnp.allclose(out_kt, ref2, atol=5e-2, rtol=5e-2), "mismatch (K-tiled path)"

    print("KERNEL_OK")
</pallas_src>

<mosaic_0001>
module attributes {stable_mosaic.version = 11 : i64} {
  func.func @_mlp_kernel(%arg0: i32, %arg1: memref<16x32xf32, #tpu.memory_space<vmem>>, %arg2: memref<32x128xbf16, #tpu.memory_space<vmem>>, %arg3: memref<1x128xf32, #tpu.memory_space<vmem>>, %arg4: memref<128x128xbf16, #tpu.memory_space<vmem>>, %arg5: memref<1x128xf32, #tpu.memory_space<vmem>>, %arg6: memref<16x128xbf16, #tpu.memory_space<vmem>>) attributes {dimension_semantics = [#tpu.dimension_semantics<parallel>], iteration_bounds = array<i64: 1>, scalar_prefetch = 0 : i64, scratch_operands = 0 : i64, tpu.core_type = #tpu.core_type<tc>, window_params = [{transform_indices = @transform_0, window_bounds = array<i64: 16, 32>}, {pipeline_mode = #tpu.pipeline_mode<synchronous>, transform_indices = @transform_1, window_bounds = array<i64: 32, 128>}, {pipeline_mode = #tpu.pipeline_mode<synchronous>, transform_indices = @transform_2, window_bounds = array<i64: 1, 128>}, {pipeline_mode = #tpu.pipeline_mode<synchronous>, transform_indices = @transform_3, window_bounds = array<i64: 128, 128>}, {pipeline_mode = #tpu.pipeline_mode<synchronous>, transform_indices = @transform_4, window_bounds = array<i64: 1, 128>}, {transform_indices = @transform_5, window_bounds = array<i64: 16, 128>}]} {
    %c0 = arith.constant 0 : index
    %c0_0 = arith.constant 0 : index
    %0 = vector.load %arg1[%c0, %c0_0] : memref<16x32xf32, #tpu.memory_space<vmem>>, vector<16x32xf32>
    %1 = arith.truncf %0 : vector<16x32xf32> to vector<16x32xbf16>
    %c0_1 = arith.constant 0 : index
    %c0_2 = arith.constant 0 : index
    %2 = vector.load %arg2[%c0_1, %c0_2] : memref<32x128xbf16, #tpu.memory_space<vmem>>, vector<32x128xbf16>
    %cst = arith.constant dense<0.000000e+00> : vector<16x128xf32>
    %3 = tpu.matmul %1, %2, %cst {dimension_numbers = #tpu.dot_dimension_numbers<[1], [0], [0], [1], [0, 0, 1, 1], [], []>} : vector<16x32xbf16>, vector<32x128xbf16>, vector<16x128xf32> -> vector<16x128xf32>
    %c0_3 = arith.constant 0 : index
    %c0_4 = arith.constant 0 : index
    %4 = vector.load %arg3[%c0_3, %c0_4] : memref<1x128xf32, #tpu.memory_space<vmem>>, vector<1x128xf32>
    %5 = vector.broadcast %4 : vector<1x128xf32> to vector<16x128xf32>
    %6 = arith.addf %3, %5 : vector<16x128xf32>
    %cst_5 = arith.constant 0.000000e+00 : f32
    %7 = vector.broadcast %cst_5 : f32 to vector<16x128xf32>
    %8 = arith.maximumf %6, %7 : vector<16x128xf32>
    %9 = arith.truncf %8 : vector<16x128xf32> to vector<16x128xbf16>
    %c0_6 = arith.constant 0 : index
    %c0_7 = arith.constant 0 : index
    %10 = vector.load %arg4[%c0_6, %c0_7] : memref<128x128xbf16, #tpu.memory_space<vmem>>, vector<128x128xbf16>
    %cst_8 = arith.constant dense<0.000000e+00> : vector<16x128xf32>
    %11 = tpu.matmul %9, %10, %cst_8 {dimension_numbers = #tpu.dot_dimension_numbers<[1], [0], [0], [1], [0, 0, 1, 1], [], []>} : vector<16x128xbf16>, vector<128x128xbf16>, vector<16x128xf32> -> vector<16x128xf32>
    %c0_9 = arith.constant 0 : index
    %c0_10 = arith.constant 0 : index
    %12 = vector.load %arg5[%c0_9, %c0_10] : memref<1x128xf32, #tpu.memory_space<vmem>>, vector<1x128xf32>
    %13 = vector.broadcast %12 : vector<1x128xf32> to vector<16x128xf32>
    %14 = arith.addf %11, %13 : vector<16x128xf32>
    %15 = arith.truncf %14 : vector<16x128xf32> to vector<16x128xbf16>
    %c0_11 = arith.constant 0 : index
    %c0_12 = arith.constant 0 : index
    %16 = vector.load %arg6[%c0_11, %c0_12] : memref<16x128xbf16, #tpu.memory_space<vmem>>, vector<16x128xbf16>
    tpu.vector_store %arg6[%c0_11, %c0_12], %15 {strides = array<i32>} : memref<16x128xbf16, #tpu.memory_space<vmem>>, vector<16x128xbf16>,
    return
  }
  func.func @transform_0(%arg0: i32) -> (i32, i32) {
    %c0_i32 = arith.constant 0 : i32
    %c0_i32_0 = arith.constant 0 : i32
    return %arg0, %c0_i32 : i32, i32
  }
  func.func @transform_1(%arg0: i32) -> (i32, i32) {
    %c0_i32 = arith.constant 0 : i32
    %c0_i32_0 = arith.constant 0 : i32
    %c0_i32_1 = arith.constant 0 : i32
    return %c0_i32, %c0_i32_0 : i32, i32
  }
  func.func @transform_2(%arg0: i32) -> (i32, i32) {
    %c0_i32 = arith.constant 0 : i32
    %c0_i32_0 = arith.constant 0 : i32
    %c0_i32_1 = arith.constant 0 : i32
    return %c0_i32, %c0_i32_0 : i32, i32
  }
  func.func @transform_3(%arg0: i32) -> (i32, i32) {
    %c0_i32 = arith.constant 0 : i32
    %c0_i32_0 = arith.constant 0 : i32
    %c0_i32_1 = arith.constant 0 : i32
    return %c0_i32, %c0_i32_0 : i32, i32
  }
  func.func @transform_4(%arg0: i32) -> (i32, i32) {
    %c0_i32 = arith.constant 0 : i32
    %c0_i32_0 = arith.constant 0 : i32
    %c0_i32_1 = arith.constant 0 : i32
    return %c0_i32, %c0_i32_0 : i32, i32
  }
  func.func @transform_5(%arg0: i32) -> (i32, i32) {
    %c0_i32 = arith.constant 0 : i32
    %c0_i32_0 = arith.constant 0 : i32
    return %arg0, %c0_i32 : i32, i32
  }
}

module attributes {stable_mosaic.version = 11 : i64} {
  func.func @_mlp_kernel(%arg0: i32, %arg1: memref<16x32xf32, #tpu.memory_space<vmem>>, %arg2: memref<32x128xbf16, #tpu.memory_space<vmem>>, %arg3: memref<1x128xf32, #tpu.memory_space<vmem>>, %arg4: memref<128x128xbf16, #tpu.memory_space<vmem>>, %arg5: memref<1x128xf32, #tpu.memory_space<vmem>>, %arg6: memref<16x128xbf16, #tpu.memory_space<vmem>>) attributes {dimension_semantics = [#tpu.dimension_semantics<parallel>], iteration_bounds = array<i64: 1>, scalar_prefetch = 0 : i64, scratch_operands = 0 : i64, tpu.core_type = #tpu.core_type<tc>, window_params = [{transform_indices = @transform_0, window_bounds = array<i64: 16, 32>}, {pipeline_mode = #tpu.pipeline_mode<synchronous>, transform_indices = @transform_1, window_bounds = array<i64: 32, 128>}, {pipeline_mode = #tpu.pipeline_mode<synchronous>, transform_indices = @transform_2, window_bounds = array<i64: 1, 128>}, {pipeline_mode = #tpu.pipeline_mode<synchronous>, transform_indices = @transform_3, window_bounds = array<i64: 128, 128>}, {pipeline_mode = #tpu.pipeline_mode<synchronous>, transform_indices = @transform_4, window_bounds = array<i64: 1, 128>}, {transform_indices = @transform_5, window_bounds = array<i64: 16, 128>}]} {
    %c0 = arith.constant 0 : index
    %c0_0 = arith.constant 0 : index
    %0 = vector.load %arg1[%c0, %c0_0] : memref<16x32xf32, #tpu.memory_space<vmem>>, vector<16x32xf32>
    %1 = arith.truncf %0 : vector<16x32xf32> to vector<16x32xbf16>
    %c0_1 = arith.constant 0 : index
    %c0_2 = arith.constant 0 : index
    %2 = vector.load %arg2[%c0_1, %c0_2] : memref<32x128xbf16, #tpu.memory_space<vmem>>, vector<32x128xbf16>
    %cst = arith.constant dense<0.000000e+00> : vector<16x128xf32>
    %3 = tpu.matmul %1, %2, %cst {dimension_numbers = #tpu.dot_dimension_numbers<[1], [0], [0], [1], [0, 0, 1, 1], [], []>} : vector<16x32xbf16>, vector<32x128xbf16>, vector<16x128xf32> -> vector<16x128xf32>
    %c0_3 = arith.constant 0 : index
    %c0_4 = arith.constant 0 : index
    %4 = vector.load %arg3[%c0_3, %c0_4] : memref<1x128xf32, #tpu.memory_space<vmem>>, vector<1x128xf32>
    %5 = vector.broadcast %4 : vector<1x128xf32> to vector<16x128xf32>
    %6 = arith.addf %3, %5 : vector<16x128xf32>
    %cst_5 = arith.constant 0.000000e+00 : f32
    %7 = vector.broadcast %cst_5 : f32 to vector<16x128xf32>
    %8 = arith.maximumf %6, %7 : vector<16x128xf32>
    %9 = arith.truncf %8 : vector<16x128xf32> to vector<16x128xbf16>
    %c0_6 = arith.constant 0 : index
    %c0_7 = arith.constant 0 : index
    %10 = vector.load %arg4[%c0_6, %c0_7] : memref<128x128xbf16, #tpu.memory_space<vmem>>, vector<128x128xbf16>
    %cst_8 = arith.constant dense<0.000000e+00> : vector<16x128xf32>
    %11 = tpu.matmul %9, %10, %cst_8 {dimension_numbers = #tpu.dot_dimension_numbers<[1], [0], [0], [1], [0, 0, 1, 1], [], []>} : vector<16x128xbf16>, vector<128x128xbf16>, vector<16x128xf32> -> vector<16x128xf32>
    %c0_9 = arith.constant 0 : index
    %c0_10 = arith.constant 0 : index
    %12 = vector.load %arg5[%c0_9, %c0_10] : memref<1x128xf32, #tpu.memory_space<vmem>>, vector<1x128xf32>
    %13 = vector.broadcast %12 : vector<1x128xf32> to vector<16x128xf32>
    %14 = arith.addf %11, %13 : vector<16x128xf32>
    %15 = arith.truncf %14 : vector<16x128xf32> to vector<16x128xbf16>
    %c0_11 = arith.constant 0 : index
    %c0_12 = arith.constant 0 : index
    %16 = vector.load %arg6[%c0_11, %c0_12] : memref<16x128xbf16, #tpu.memory_space<vmem>>, vector<16x128xbf16>
    tpu.vector_store %arg6[%c0_11, %c0_12], %15 {strides = array<i32>} : memref<16x128xbf16, #tpu.memory_space<vmem>>, vector<16x128xbf16>,
    return
  }
  func.func @transform_0(%arg0: i32) -> (i32, i32) {
    %c0_i32 = arith.constant 0 : i32
    %c0_i32_0 = arith.constant 0 : i32
    return %arg0, %c0_i32 : i32, i32
  }
  func.func @transform_1(%arg0: i32) -> (i32, i32) {
    %c0_i32 = arith.constant 0 : i32
    %c0_i32_0 = arith.constant 0 : i32
    %c0_i32_1 = arith.constant 0 : i32
    return %c0_i32, %c0_i32_0 : i32, i32
  }
  func.func @transform_2(%arg0: i32) -> (i32, i32) {
    %c0_i32 = arith.constant 0 : i32
    %c0_i32_0 = arith.constant 0 : i32
    %c0_i32_1 = arith.constant 0 : i32
    return %c0_i32, %c0_i32_0 : i32, i32
  }
  func.func @transform_3(%arg0: i32) -> (i32, i32) {
    %c0_i32 = arith.constant 0 : i32
    %c0_i32_0 = arith.constant 0 : i32
    %c0_i32_1 = arith.constant 0 : i32
    return %c0_i32, %c0_i32_0 : i32, i32
  }
  func.func @transform_4(%arg0: i32) -> (i32, i32) {
    %c0_i32 = arith.constant 0 : i32
    %c0_i32_0 = arith.constant 0 : i32
    %c0_i32_1 = arith.constant 0 : i32
    return %c0_i32, %c0_i32_0 : i32, i32
  }
  func.func @transform_5(%arg0: i32) -> (i32, i32) {
    %c0_i32 = arith.constant 0 : i32
    %c0_i32_0 = arith.constant 0 : i32
    return %arg0, %c0_i32 : i32, i32
  }
}

</mosaic_0001>

<llo_original>
// kernel: tpu_custom_call.1
$region0: #{tpu_custom_call.1}
  #allocation0 [shape = 'u32[]', space=smem, size = 0x4, offset = 0x4, fixed_abs, tag = 'smem constant byte address 0x4 - core index']
  #allocation1 [shape = 'u32[72,128]{1,0:T(1,128)}', space=vmem, size = 0x9000, scoped, tag = 'internal scratch']
  %s0 = inlined_call_operand.hbm [shape: f32[16,32], index: 0, kind: input, shape index: {}]
  %s1 = inlined_call_operand.hbm [shape: bf16[32,128], index: 1, kind: input, shape index: {}]
  %s2 = inlined_call_operand.vmem [shape: f32[1,128], index: 2, kind: input, shape index: {}]
  %s3 = inlined_call_operand.hbm [shape: bf16[128,128], index: 3, kind: input, shape index: {}]
  %s4 = inlined_call_operand.vmem [shape: f32[1,128], index: 4, kind: input, shape index: {}]
  %s5 = inlined_call_operand.hbm [shape: bf16[16,128], index: 5, kind: output, shape index: {}]
  %s6 = sld [smem:[#allocation0]]
  $region42: #{tpu_custom_call.1} parent=0
    _
  %s8 = ssub.s32 1, %s6
  %s9 = scalar_select 0, %s8, %s6
  $region1: #{tpu_custom_call.1} parent=0
    #allocation2 [shape = 'u8[8192]{0}', space=vmem, size = 0x2000, scoped, tag = 'input window, operand 0, single buffered']
    #allocation3 [shape = 's32[1]{0}', space=sflag, size = 0x4, scoped, tag = 'scoped memory for tpu_custom_call.1']
    #allocation4 [shape = 's32[1]{0}', space=sflag, size = 0x4, scoped, tag = 'scoped memory for tpu_custom_call.1']
    #allocation5 [shape = 'u8[8192]{0}', space=vmem, size = 0x2000, scoped, tag = 'input window, operand 1, single buffered']
    #allocation6 [shape = 's32[1]{0}', space=sflag, size = 0x4, scoped, tag = 'scoped memory for tpu_custom_call.1']
    #allocation7 [shape = 'u8[32768]{0}', space=vmem, size = 0x8000, scoped, tag = 'input window, operand 3, single buffered']
    #allocation8 [shape = 'u8[4096]{0}', space=vmem, size = 0x1000, scoped, tag = 'output window, operand 0, single buffered']
    %10 = vsyncpa [#allocation3], 0
    %11 = vsyncpa [#allocation6], 0
    %12 = vsyncpa [#allocation4], 0
    // Predicated region
    $region2: #{tpu_custom_call.1} parent=1 // pred_check
      _
    $region3: #{tpu_custom_call.1} parent=1 // pred_check_branch
      %14 = sbr.rel (0) target = $region5
    $region4: #{tpu_custom_call.1} parent=1 // pred_region
      %16 = vsyncadd [#allocation3], 0
      %s17 = sshll.u32 %s0, 4
      %s18 = int_to_ptr.hbm [resolvable:$true] %s17
      %s19 = sshll.u32 [#allocation2], 4
      %s20 = int_to_ptr.vmem [resolvable:$true] %s19
      %25 = dma.hbm_to_vmem [thread:$0]  %s18, 256, %s20, [#allocation3], 128, 128, 8
    $region5: #{tpu_custom_call.1} parent=1 // pred_fallthru
      _
    // Predicated region
    $region6: #{tpu_custom_call.1} parent=1 // pred_check
      _
    $region7: #{tpu_custom_call.1} parent=1 // pred_check_branch
      %27 = sbr.rel (0) target = $region9
    $region8: #{tpu_custom_call.1} parent=1 // pred_region
      %29 = vsyncadd [#allocation6], 0
      %s30 = sshll.u32 %s1, 4
      %s31 = int_to_ptr.hbm [resolvable:$true] %s30
      %s32 = sshll.u32 [#allocation5], 4
      %s33 = int_to_ptr.vmem [resolvable:$true] %s32
      %38 = dma.hbm_to_vmem [thread:$0]  %s31, 256, %s33, [#allocation6], 64, 64, 4
    $region9: #{tpu_custom_call.1} parent=1 // pred_fallthru
      _
    // Predicated region
    $region10: #{tpu_custom_call.1} parent=1 // pred_check
      _
    $region11: #{tpu_custom_call.1} parent=1 // pred_check_branch
      %40 = sbr.rel (0) target = $region13
    $region12: #{tpu_custom_call.1} parent=1 // pred_region
      _
    $region13: #{tpu_custom_call.1} parent=1 // pred_fallthru
      _
    // Predicated region
    $region14: #{tpu_custom_call.1} parent=1 // pred_check
      _
    $region15: #{tpu_custom_call.1} parent=1 // pred_check_branch
      %42 = sbr.rel (0) target = $region17
    $region16: #{tpu_custom_call.1} parent=1 // pred_region
      %44 = vsyncadd [#allocation6], 0
      %s45 = sshll.u32 %s3, 4
      %s46 = int_to_ptr.hbm [resolvable:$true] %s45
      %s47 = sshll.u32 [#allocation7], 4
      %s48 = int_to_ptr.vmem [resolvable:$true] %s47
      %53 = dma.hbm_to_vmem [thread:$0]  %s46, 1024, %s48, [#allocation6], 64, 64, 4
    $region17: #{tpu_custom_call.1} parent=1 // pred_fallthru
      _
    // Predicated region
    $region18: #{tpu_custom_call.1} parent=1 // pred_check
      _
    $region19: #{tpu_custom_call.1} parent=1 // pred_check_branch
      %55 = sbr.rel (0) target = $region21
    $region20: #{tpu_custom_call.1} parent=1 // pred_region
      _
    $region21: #{tpu_custom_call.1} parent=1 // pred_fallthru
      _
    // Predicated region
    $region22: #{tpu_custom_call.1} parent=1 // pred_check
      _
    $region23: #{tpu_custom_call.1} parent=1 // pred_check_branch
      %57 = sbr.rel (0) target = $region25
    $region24: #{tpu_custom_call.1} parent=1 // pred_region
      %59 = dma.done [#allocation3], 256
    $region25: #{tpu_custom_call.1} parent=1 // pred_fallthru
      _
    // Predicated region
    $region26: #{tpu_custom_call.1} parent=1 // pred_check
      _
    $region27: #{tpu_custom_call.1} parent=1 // pred_check_branch
      %61 = sbr.rel (0) target = $region29
    $region28: #{tpu_custom_call.1} parent=1 // pred_region
      %63 = dma.done [#allocation6], 256
    $region29: #{tpu_custom_call.1} parent=1 // pred_fallthru
      _
    // Predicated region
    $region30: #{tpu_custom_call.1} parent=1 // pred_check
      _
    $region31: #{tpu_custom_call.1} parent=1 // pred_check_branch
      %65 = sbr.rel (0) target = $region33
    $region32: #{tpu_custom_call.1} parent=1 // pred_region
      %67 = dma.done [#allocation6], 1024
    $region33: #{tpu_custom_call.1} parent=1 // pred_fallthru
      _
    %v69 = vld [vmem:[#allocation2] sm:$0xff]
    %v70 = vld [vmem:[#allocation2 + $0x8] sm:$0xff]
    %v71 = vpack.c.bf16 %v70, %v69
    %v72 = vld [vmem:[#allocation5] sm:$0xf]
    %v73 = vld [vmem:[#allocation5 + $0x4] sm:$0xf]
    %v74 = vld [vmem:[#allocation5 + $0x8] sm:$0xf]
    %v75 = vld [vmem:[#allocation5 + $0xc] sm:$0xf]
    %v76 = vld [vmem:[%s2] sm:$0x1]
    %v78 = vperm.slane %v76, 0
    %v84 = vunpack.c.l.b16 %v72
    %v85 = vunpack.c.l.b16 %v73
    %v86 = vunpack.c.l.b16 %v74
    %v87 = vunpack.c.l.b16 %v75
    %v88 = vpack.c.b16 %v85, %v84
    %v89 = vpack.c.b16 %v87, %v86
    %vm92 = vcmask 261120
    %v94 = vsel %vm92, %v71, 0
    %96 = vmatpush.bf16.msra.mxu0 0
    %97 = vmatpush.bf16.msra.mxu0 0
    %98 = vmatpush.bf16.msra.mxu0 0
    %99 = vmatpush.bf16.msra.mxu0 0
    %100 = vmatpush.bf16.msra.mxu0 0
    %101 = vmatpush.bf16.msra.mxu0 0
    %102 = vmatpush.bf16.msra.mxu0 %v89
    %103 = vmatpush.bf16.msra.mxu0 %v88
    %104 = vmatmul.bf16.gmra.mxu0 %v94
    %v105 = vpop.f32.mrf.mxu0
    %v106 = vadd.f32 %v78, %v105
    %v107 = vpop.f32.mrf.mxu0
    %v108 = vadd.f32 %v78, %v107
    %109 = vdwg.mxu0
    %v110 = vmax.f32 %v106, 0.0
    %v111 = vmax.f32 %v108, 0.0
    %v112 = vpack.c.bf16 %v111, %v110
    %v113 = vld [vmem:[#allocation7] sm:$0xf]
    %v114 = vld [vmem:[#allocation7 + $0x4] sm:$0xf]
    %v115 = vld [vmem:[#allocation7 + $0x8] sm:$0xf]
    %v116 = vld [vmem:[#allocation7 + $0xc] sm:$0xf]
    %v117 = vld [vmem:[#allocation7 + $0x10] sm:$0xf]
    %v118 = vld [vmem:[#allocation7 + $0x14] sm:$0xf]
    %v119 = vld [vmem:[#allocation7 + $0x18] sm:$0xf]
    %v120 = vld [vmem:[#allocation7 + $0x1c] sm:$0xf]
    %v121 = vld [vmem:[#allocation7 + $0x20] sm:$0xf]
    %v122 = vld [vmem:[#allocation7 + $0x24] sm:$0xf]
    %v123 = vld [vmem:[#allocation7 + $0x28] sm:$0xf]
    %v124 = vld [vmem:[#allocation7 + $0x2c] sm:$0xf]
    %v125 = vld [vmem:[#allocation7 + $0x30] sm:$0xf]
    %v126 = vld [vmem:[#allocation7 + $0x34] sm:$0xf]
    %v127 = vld [vmem:[#allocation7 + $0x38] sm:$0xf]
    %v128 = vld [vmem:[#allocation7 + $0x3c] sm:$0xf]
    %v129 = vld [vmem:[%s4] sm:$0x1]
    %v131 = vperm.slane %v129, 0
    %v149 = vunpack.c.l.b16 %v113
    %v150 = vunpack.c.l.b16 %v114
    %v151 = vunpack.c.l.b16 %v115
    %v152 = vunpack.c.l.b16 %v116
    %v153 = vunpack.c.l.b16 %v117
    %v154 = vunpack.c.l.b16 %v118
    %v155 = vunpack.c.l.b16 %v119
    %v156 = vunpack.c.l.b16 %v120
    %v157 = vunpack.c.l.b16 %v121
    %v158 = vunpack.c.l.b16 %v122
    %v159 = vunpack.c.l.b16 %v123
    %v160 = vunpack.c.l.b16 %v124
    %v161 = vunpack.c.l.b16 %v125
    %v162 = vunpack.c.l.b16 %v126
    %v163 = vunpack.c.l.b16 %v127
    %v164 = vunpack.c.l.b16 %v128
    %v165 = vpack.c.b16 %v150, %v149
    %v166 = vpack.c.b16 %v152, %v151
    %v167 = vpack.c.b16 %v154, %v153
    %v168 = vpack.c.b16 %v156, %v155
    %v169 = vpack.c.b16 %v158, %v157
    %v170 = vpack.c.b16 %v160, %v159
    %v171 = vpack.c.b16 %v162, %v161
    %v172 = vpack.c.b16 %v164, %v163
    %181 = vmatpush.bf16.msra.mxu0 %v172
    %182 = vmatpush.bf16.msra.mxu0 %v171
    %183 = vmatpush.bf16.msra.mxu0 %v170
    %184 = vmatpush.bf16.msra.mxu0 %v169
    %185 = vmatpush.bf16.msra.mxu0 %v168
    %186 = vmatpush.bf16.msra.mxu0 %v167
    %187 = vmatpush.bf16.msra.mxu0 %v166
    %188 = vmatpush.bf16.msra.mxu0 %v165
    %189 = vmatmul.bf16.gmra.mxu0 %v112
    %v190 = vpop.f32.mrf.mxu0
    %v191 = vadd.f32 %v131, %v190
    %v192 = vpop.f32.mrf.mxu0
    %v193 = vadd.f32 %v131, %v192
    %194 = vdwg.mxu0
    %v195 = vpack.c.bf16 %v191, %v191
    %v196 = vpack.c.bf16 %v193, %v193
    %197 = vst [vmem:[#allocation8] sm:$0xf] %v195
    %198 = vst [vmem:[#allocation8 + $0x4] sm:$0xf] %v196
    // Predicated region
    $region34: #{tpu_custom_call.1} parent=1 // pred_check
      _
    $region35: #{tpu_custom_call.1} parent=1 // pred_check_branch
      %200 = sbr.rel (0) target = $region37
    $region36: #{tpu_custom_call.1} parent=1 // pred_region
      %202 = vsyncadd [#allocation4], 0
      %s203 = sshll.u32 [#allocation8], 4
      %s204 = int_to_ptr.vmem [resolvable:$true] %s203
      %s205 = sshll.u32 %s5, 4
      %s206 = int_to_ptr.hbm [resolvable:$true] %s205
      %211 = dma.vmem_to_hbm [thread:$0]  %s204, 128, %s206, [#allocation4], 64, 64, 4
    $region37: #{tpu_custom_call.1} parent=1 // pred_fallthru
      _
    // Predicated region
    $region38: #{tpu_custom_call.1} parent=1 // pred_check
      _
    $region39: #{tpu_custom_call.1} parent=1 // pred_check_branch
      %213 = sbr.rel (0) target = $region41
    $region40: #{tpu_custom_call.1} parent=1 // pred_region
      %215 = dma.done [#allocation4], 128
    $region41: #{tpu_custom_call.1} parent=1 // pred_fallthru
      _
    %216 = vsyncpa [#allocation3], 1
    %217 = vsyncpa [#allocation6], 1
    %218 = vsyncpa [#allocation4], 1

// kernel: tpu_custom_call.1
$region0: #{tpu_custom_call.1}
  #allocation0 [shape = 'u32[]', space=smem, size = 0x4, offset = 0x4, fixed_abs, tag = 'smem constant byte address 0x4 - core index']
  #allocation1 [shape = 'u32[72,128]{1,0:T(1,128)}', space=vmem, size = 0x9000, scoped, tag = 'internal scratch']
  %s0 = inlined_call_operand.hbm [shape: f32[16,32], index: 0, kind: input, shape index: {}]
  %s1 = inlined_call_operand.hbm [shape: bf16[32,128], index: 1, kind: input, shape index: {}]
  %s2 = inlined_call_operand.vmem [shape: f32[1,128], index: 2, kind: input, shape index: {}]
  %s3 = inlined_call_operand.hbm [shape: bf16[128,128], index: 3, kind: input, shape index: {}]
  %s4 = inlined_call_operand.vmem [shape: f32[1,128], index: 4, kind: input, shape index: {}]
  %s5 = inlined_call_operand.hbm [shape: bf16[16,128], index: 5, kind: output, shape index: {}]
  %s6 = sld [smem:[#allocation0]]
  $region42: #{tpu_custom_call.1} parent=0
    _
  %s8 = ssub.s32 1, %s6
  %s9 = scalar_select 0, %s8, %s6
  $region1: #{tpu_custom_call.1} parent=0
    #allocation2 [shape = 'u8[8192]{0}', space=vmem, size = 0x2000, scoped, tag = 'input window, operand 0, single buffered']
    #allocation3 [shape = 's32[1]{0}', space=sflag, size = 0x4, scoped, tag = 'scoped memory for tpu_custom_call.1']
    #allocation4 [shape = 's32[1]{0}', space=sflag, size = 0x4, scoped, tag = 'scoped memory for tpu_custom_call.1']
    #allocation5 [shape = 'u8[8192]{0}', space=vmem, size = 0x2000, scoped, tag = 'input window, operand 1, single buffered']
    #allocation6 [shape = 's32[1]{0}', space=sflag, size = 0x4, scoped, tag = 'scoped memory for tpu_custom_call.1']
    #allocation7 [shape = 'u8[32768]{0}', space=vmem, size = 0x8000, scoped, tag = 'input window, operand 3, single buffered']
    #allocation8 [shape = 'u8[4096]{0}', space=vmem, size = 0x1000, scoped, tag = 'output window, operand 0, single buffered']
    %10 = vsyncpa [#allocation3], 0
    %11 = vsyncpa [#allocation6], 0
    %12 = vsyncpa [#allocation4], 0
    // Predicated region
    $region2: #{tpu_custom_call.1} parent=1 // pred_check
      _
    $region3: #{tpu_custom_call.1} parent=1 // pred_check_branch
      %14 = sbr.rel (0) target = $region5
    $region4: #{tpu_custom_call.1} parent=1 // pred_region
      %16 = vsyncadd [#allocation3], 0
      %s17 = sshll.u32 %s0, 4
      %s18 = int_to_ptr.hbm [resolvable:$true] %s17
      %s19 = sshll.u32 [#allocation2], 4
      %s20 = int_to_ptr.vmem [resolvable:$true] %s19
      %25 = dma.hbm_to_vmem [thread:$0]  %s18, 256, %s20, [#allocation3], 128, 128, 8
    $region5: #{tpu_custom_call.1} parent=1 // pred_fallthru
      _
    // Predicated region
    $region6: #{tpu_custom_call.1} parent=1 // pred_check
      _
    $region7: #{tpu_custom_call.1} parent=1 // pred_check_branch
      %27 = sbr.rel (0) target = $region9
    $region8: #{tpu_custom_call.1} parent=1 // pred_region
      %29 = vsyncadd [#allocation6], 0
      %s30 = sshll.u32 %s1, 4
      %s31 = int_to_ptr.hbm [resolvable:$true] %s30
      %s32 = sshll.u32 [#allocation5], 4
      %s33 = int_to_ptr.vmem [resolvable:$true] %s32
      %38 = dma.hbm_to_vmem [thread:$0]  %s31, 256, %s33, [#allocation6], 64, 64, 4
    $region9: #{tpu_custom_call.1} parent=1 // pred_fallthru
      _
    // Predicated region
    $region10: #{tpu_custom_call.1} parent=1 // pred_check
      _
    $region11: #{tpu_custom_call.1} parent=1 // pred_check_branch
      %40 = sbr.rel (0) target = $region13
    $region12: #{tpu_custom_call.1} parent=1 // pred_region
      _
    $region13: #{tpu_custom_call.1} parent=1 // pred_fallthru
      _
    // Predicated region
    $region14: #{tpu_custom_call.1} parent=1 // pred_check
      _
    $region15: #{tpu_custom_call.1} parent=1 // pred_check_branch
      %42 = sbr.rel (0) target = $region17
    $region16: #{tpu_custom_call.1} parent=1 // pred_region
      %44 = vsyncadd [#allocation6], 0
      %s45 = sshll.u32 %s3, 4
      %s46 = int_to_ptr.hbm [resolvable:$true] %s45
      %s47 = sshll.u32 [#allocation7], 4
      %s48 = int_to_ptr.vmem [resolvable:$true] %s47
      %53 = dma.hbm_to_vmem [thread:$0]  %s46, 1024, %s48, [#allocation6], 64, 64, 4
    $region17: #{tpu_custom_call.1} parent=1 // pred_fallthru
      _
    // Predicated region
    $region18: #{tpu_custom_call.1} parent=1 // pred_check
      _
    $region19: #{tpu_custom_call.1} parent=1 // pred_check_branch
      %55 = sbr.rel (0) target = $region21
    $region20: #{tpu_custom_call.1} parent=1 // pred_region
      _
    $region21: #{tpu_custom_call.1} parent=1 // pred_fallthru
      _
    // Predicated region
    $region22: #{tpu_custom_call.1} parent=1 // pred_check
      _
    $region23: #{tpu_custom_call.1} parent=1 // pred_check_branch
      %57 = sbr.rel (0) target = $region25
    $region24: #{tpu_custom_call.1} parent=1 // pred_region
      %59 = dma.done [#allocation3], 256
    $region25: #{tpu_custom_call.1} parent=1 // pred_fallthru
      _
    // Predicated region
    $region26: #{tpu_custom_call.1} parent=1 // pred_check
      _
    $region27: #{tpu_custom_call.1} parent=1 // pred_check_branch
      %61 = sbr.rel (0) target = $region29
    $region28: #{tpu_custom_call.1} parent=1 // pred_region
      %63 = dma.done [#allocation6], 256
    $region29: #{tpu_custom_call.1} parent=1 // pred_fallthru
      _
    // Predicated region
    $region30: #{tpu_custom_call.1} parent=1 // pred_check
      _
    $region31: #{tpu_custom_call.1} parent=1 // pred_check_branch
      %65 = sbr.rel (0) target = $region33
    $region32: #{tpu_custom_call.1} parent=1 // pred_region
      %67 = dma.done [#allocation6], 1024
    $region33: #{tpu_custom_call.1} parent=1 // pred_fallthru
      _
    %v69 = vld [vmem:[#allocation2] sm:$0xff]
    %v70 = vld [vmem:[#allocation2 + $0x8] sm:$0xff]
    %v71 = vpack.c.bf16 %v70, %v69
    %v72 = vld [vmem:[#allocation5] sm:$0xf]
    %v73 = vld [vmem:[#allocation5 + $0x4] sm:$0xf]
    %v74 = vld [vmem:[#allocation5 + $0x8] sm:$0xf]
    %v75 = vld [vmem:[#allocation5 + $0xc] sm:$0xf]
    %v76 = vld [vmem:[%s2] sm:$0x1]
    %v78 = vperm.slane %v76, 0
    %v84 = vunpack.c.l.b16 %v72
    %v85 = vunpack.c.l.b16 %v73
    %v86 = vunpack.c.l.b16 %v74
    %v87 = vunpack.c.l.b16 %v75
    %v88 = vpack.c.b16 %v85, %v84
    %v89 = vpack.c.b16 %v87, %v86
    %vm92 = vcmask 261120
    %v94 = vsel %vm92, %v71, 0
    %96 = vmatpush.bf16.msra.mxu0 0
    %97 = vmatpush.bf16.msra.mxu0 0
    %98 = vmatpush.bf16.msra.mxu0 0
    %99 = vmatpush.bf16.msra.mxu0 0
    %100 = vmatpush.bf16.msra.mxu0 0
    %101 = vmatpush.bf16.msra.mxu0 0
    %102 = vmatpush.bf16.msra.mxu0 %v89
    %103 = vmatpush.bf16.msra.mxu0 %v88
    %104 = vmatmul.bf16.gmra.mxu0 %v94
    %v105 = vpop.f32.mrf.mxu0
    %v106 = vadd.f32 %v78, %v105
    %v107 = vpop.f32.mrf.mxu0
    %v108 = vadd.f32 %v78, %v107
    %109 = vdwg.mxu0
    %v110 = vmax.f32 %v106, 0.0
    %v111 = vmax.f32 %v108, 0.0
    %v112 = vpack.c.bf16 %v111, %v110
    %v113 = vld [vmem:[#allocation7] sm:$0xf]
    %v114 = vld [vmem:[#allocation7 + $0x4] sm:$0xf]
    %v115 = vld [vmem:[#allocation7 + $0x8] sm:$0xf]
    %v116 = vld [vmem:[#allocation7 + $0xc] sm:$0xf]
    %v117 = vld [vmem:[#allocation7 + $0x10] sm:$0xf]
    %v118 = vld [vmem:[#allocation7 + $0x14] sm:$0xf]
    %v119 = vld [vmem:[#allocation7 + $0x18] sm:$0xf]
    %v120 = vld [vmem:[#allocation7 + $0x1c] sm:$0xf]
    %v121 = vld [vmem:[#allocation7 + $0x20] sm:$0xf]
    %v122 = vld [vmem:[#allocation7 + $0x24] sm:$0xf]
    %v123 = vld [vmem:[#allocation7 + $0x28] sm:$0xf]
    %v124 = vld [vmem:[#allocation7 + $0x2c] sm:$0xf]
    %v125 = vld [vmem:[#allocation7 + $0x30] sm:$0xf]
    %v126 = vld [vmem:[#allocation7 + $0x34] sm:$0xf]
    %v127 = vld [vmem:[#allocation7 + $0x38] sm:$0xf]
    %v128 = vld [vmem:[#allocation7 + $0x3c] sm:$0xf]
    %v129 = vld [vmem:[%s4] sm:$0x1]
    %v131 = vperm.slane %v129, 0
    %v149 = vunpack.c.l.b16 %v113
    %v150 = vunpack.c.l.b16 %v114
    %v151 = vunpack.c.l.b16 %v115
    %v152 = vunpack.c.l.b16 %v116
    %v153 = vunpack.c.l.b16 %v117
    %v154 = vunpack.c.l.b16 %v118
    %v155 = vunpack.c.l.b16 %v119
    %v156 = vunpack.c.l.b16 %v120
    %v157 = vunpack.c.l.b16 %v121
    %v158 = vunpack.c.l.b16 %v122
    %v159 = vunpack.c.l.b16 %v123
    %v160 = vunpack.c.l.b16 %v124
    %v161 = vunpack.c.l.b16 %v125
    %v162 = vunpack.c.l.b16 %v126
    %v163 = vunpack.c.l.b16 %v127
    %v164 = vunpack.c.l.b16 %v128
    %v165 = vpack.c.b16 %v150, %v149
    %v166 = vpack.c.b16 %v152, %v151
    %v167 = vpack.c.b16 %v154, %v153
    %v168 = vpack.c.b16 %v156, %v155
    %v169 = vpack.c.b16 %v158, %v157
    %v170 = vpack.c.b16 %v160, %v159
    %v171 = vpack.c.b16 %v162, %v161
    %v172 = vpack.c.b16 %v164, %v163
    %181 = vmatpush.bf16.msra.mxu0 %v172
    %182 = vmatpush.bf16.msra.mxu0 %v171
    %183 = vmatpush.bf16.msra.mxu0 %v170
    %184 = vmatpush.bf16.msra.mxu0 %v169
    %185 = vmatpush.bf16.msra.mxu0 %v168
    %186 = vmatpush.bf16.msra.mxu0 %v167
    %187 = vmatpush.bf16.msra.mxu0 %v166
    %188 = vmatpush.bf16.msra.mxu0 %v165
    %189 = vmatmul.bf16.gmra.mxu0 %v112
    %v190 = vpop.f32.mrf.mxu0
    %v191 = vadd.f32 %v131, %v190
    %v192 = vpop.f32.mrf.mxu0
    %v193 = vadd.f32 %v131, %v192
    %194 = vdwg.mxu0
    %v195 = vpack.c.bf16 %v191, %v191
    %v196 = vpack.c.bf16 %v193, %v193
    %197 = vst [vmem:[#allocation8] sm:$0xf] %v195
    %198 = vst [vmem:[#allocation8 + $0x4] sm:$0xf] %v196
    // Predicated region
    $region34: #{tpu_custom_call.1} parent=1 // pred_check
      _
    $region35: #{tpu_custom_call.1} parent=1 // pred_check_branch
      %200 = sbr.rel (0) target = $region37
    $region36: #{tpu_custom_call.1} parent=1 // pred_region
      %202 = vsyncadd [#allocation4], 0
      %s203 = sshll.u32 [#allocation8], 4
      %s204 = int_to_ptr.vmem [resolvable:$true] %s203
      %s205 = sshll.u32 %s5, 4
      %s206 = int_to_ptr.hbm [resolvable:$true] %s205
      %211 = dma.vmem_to_hbm [thread:$0]  %s204, 128, %s206, [#allocation4], 64, 64, 4
    $region37: #{tpu_custom_call.1} parent=1 // pred_fallthru
      _
    // Predicated region
    $region38: #{tpu_custom_call.1} parent=1 // pred_check
      _
    $region39: #{tpu_custom_call.1} parent=1 // pred_check_branch
      %213 = sbr.rel (0) target = $region41
    $region40: #{tpu_custom_call.1} parent=1 // pred_region
      %215 = dma.done [#allocation4], 128
    $region41: #{tpu_custom_call.1} parent=1 // pred_fallthru
      _
    %216 = vsyncpa [#allocation3], 1
    %217 = vsyncpa [#allocation6], 1
    %218 = vsyncpa [#allocation4], 1

</llo_original>
